<compile_context>
chip_gen: v7x
topology: tpu7x:2x2x1
jax: 0.10.0
libtpu: 0.0.40
codegen_flags: <defaults>
</compile_context>

<pallas_src>
import functools
import math

import jax
import jax.numpy as jnp
from jax.experimental import pallas as pl
from jax.experimental.pallas import tpu as pltpu


def _qrnn_kernel(x_ref, w_ref, b_ref, h0_ref,                  # inputs
                 h_out_ref, hn_ref,                            # outputs
                 fz_ref, omf_ref, o_ref, c_slab_ref, c_carry_ref,  # scratch
                 *, time_block, batch, hidden_tile, fused, last_row0, unroll):
    blk = pl.program_id(1)

    @pl.when(blk == 0)
    def _():
        # (Re)initialize the carried cell state from the initial hidden state
        # for this hidden tile.
        c_carry_ref[...] = h0_ref[...].astype(jnp.float32)

    # ---- Parallel-in-time slab phase (MXU + EUP + VPU, off the serial path).
    x = x_ref[...]                                             # (TB*B, D)
    if fused:
        # One matmul for all three gates: X read once, MXU N dim = 3*Ht.
        y = jnp.dot(x, w_ref[...], preferred_element_type=jnp.float32)
        z_pre = y[:, 0 * hidden_tile:1 * hidden_tile] + b_ref[0]
        f_pre = y[:, 1 * hidden_tile:2 * hidden_tile] + b_ref[1]
        o_pre = y[:, 2 * hidden_tile:3 * hidden_tile] + b_ref[2]
    else:
        # Per-gate path (hidden tile not a multiple of 128): each gate's
        # activation is a whole lane-aligned slab.
        z_pre = jnp.dot(x, w_ref[0], preferred_element_type=jnp.float32) + b_ref[0]
        f_pre = jnp.dot(x, w_ref[1], preferred_element_type=jnp.float32) + b_ref[1]
        o_pre = jnp.dot(x, w_ref[2], preferred_element_type=jnp.float32) + b_ref[2]

    z = jnp.tanh(z_pre)
    f = jax.nn.sigmoid(f_pre)
    # Hoist every c-independent elementwise op out of the serial loop.
    fz_ref[...] = f * z                                        # f_t * z_t
    omf_ref[...] = 1.0 - f                                     # 1 - f_t
    o_ref[...] = jax.nn.sigmoid(o_pre)                         # output gate

    # ---- Serial recurrence: c_t = fz_t + omf_t * c_{t-1}  (pure VPU chain).
    c0 = c_carry_ref[...]                                      # (B, Ht) f32
    if time_block <= 8:
        # Short block: fully unrolled with static, sublane-aligned slices.
        c = c0
        for t in range(time_block):
            r0 = t * batch
            c = fz_ref[r0:r0 + batch, :] + omf_ref[r0:r0 + batch, :] * c
            c_slab_ref[r0:r0 + batch, :] = c
    else:
        # Long block: fori_loop with moderate unroll bounds vreg live ranges
        # (the gate slabs stay in VMEM and are sliced per step).
        def body(t, c):
            r0 = t * batch
            if batch % 8 == 0:
                r0 = pl.multiple_of(r0, 8)
            c = fz_ref[pl.ds(r0, batch), :] + omf_ref[pl.ds(r0, batch), :] * c
            c_slab_ref[pl.ds(r0, batch), :] = c
            return c

        c = jax.lax.fori_loop(0, time_block, body, c0,
                              unroll=min(unroll, time_block))
    c_carry_ref[...] = c

    # ---- Deferred output gate: one slab multiply + cast + lane-dense store.
    h_out_ref[...] = (o_ref[...] * c_slab_ref[...]).astype(h_out_ref.dtype)

    # h_n = C at the last *real* timestep (padding, if any, is at the end of
    # the last block).  Written only on the last block.
    @pl.when(blk == pl.num_programs(1) - 1)
    def _():
        hn_ref[...] = c_slab_ref[last_row0:last_row0 + batch, :].astype(
            hn_ref.dtype)


def _vmem_capacity_bytes():
    try:
        return int(pltpu.get_tpu_info().vmem_capacity_bytes)
    except Exception:                                # pragma: no cover
        return 64 * 1024 * 1024                      # conservative (v7x-sized)


def _pick_time_block(seq_len, batch, input_size, hidden_tile,
                     mm_bytes, out_bytes, vmem_budget):
    """Largest time block whose working set fits the VMEM budget."""
    # Loop-invariant terms: W (double-buffered by the auto pipeline), bias,
    # h0, carried c, plus slack.
    fixed = (2 * 3 * input_size * hidden_tile * mm_bytes
             + 3 * batch * hidden_tile * 4
             + 2 * 1024 * 1024)
    # Per-timestep terms: X block (x2 double-buffer), H block (x2),
    # four f32 slabs (fz, 1-f, o, C).
    per_tb = batch * (2 * input_size * mm_bytes
                      + 2 * hidden_tile * out_bytes
                      + 4 * hidden_tile * 4)
    tb = max(1, (vmem_budget - fixed) // per_tb)
    tb = int(min(tb, 256))
    # rows_per_block = TB*B must be a multiple of 8 for clean (8,128) tiling.
    step = 8 // math.gcd(batch, 8)
    tb = max(step, (tb // step) * step)
    # No point making the block longer than the (padded) sequence.
    tb = min(tb, -(-seq_len // step) * step)
    return tb


def qrnn_layer_forward(X, W, b, hidden=None, *, time_block=None,
                       matmul_dtype=None, out_dtype=None, num_hidden_tiles=1):
    """QRNN-fo forward (window=1, unidirectional, zoneout=0, tanh).

    Args:
      X:      (seq_len, batch, input_size) float32
      W:      (3*hidden_size, input_size)  float32 (PyTorch nn.Linear weight)
      b:      (3*hidden_size,)             float32
      hidden: optional (1, batch, hidden_size) initial hidden state
      time_block:   timesteps per grid step (default: VMEM-budget derived)
      matmul_dtype: dtype fed to the MXU (bf16 recommended on v6e/v7x);
                    recurrence / activations / cell state stay f32.
      out_dtype:    dtype of H / h_n (default: X.dtype).
      num_hidden_tiles: split the hidden dim into independent tiles along a
                    leading "parallel" grid axis (set 2 on v7x to use both
                    TensorCores; requires (hidden_size//tiles) % 128 == 0).

    Returns:
      H:   (seq_len, batch, hidden_size)
      h_n: (1, batch, hidden_size)
    """
    seq_len, batch, input_size = X.shape
    hidden_size = W.shape[0] // 3
    if matmul_dtype is None:
        matmul_dtype = X.dtype
    if out_dtype is None:
        out_dtype = X.dtype

    assert hidden_size % num_hidden_tiles == 0
    hidden_tile = hidden_size // num_hidden_tiles
    if num_hidden_tiles > 1:
        assert hidden_tile % 128 == 0, (
            "hidden tiles must be lane-aligned (multiples of 128)")
    fused = (hidden_tile % 128 == 0)

    mm_bytes = jnp.dtype(matmul_dtype).itemsize
    out_bytes = jnp.dtype(out_dtype).itemsize
    vmem_cap = _vmem_capacity_bytes()
    vmem_limit = int(0.75 * vmem_cap)

    if time_block is None:
        time_block = _pick_time_block(seq_len, batch, input_size, hidden_tile,
                                      mm_bytes, out_bytes, int(0.7 * vmem_cap))
    # Keep rows_per_block a multiple of 8 (sublane tiles).
    step = 8 // math.gcd(batch, 8)
    if time_block % step != 0:
        time_block = -(-time_block // step) * step

    # Pad the sequence up to a multiple of time_block (crop after).
    num_blocks = -(-seq_len // time_block)
    seq_pad = num_blocks * time_block
    rows_per_block = time_block * batch
    last_row0 = ((seq_len - 1) % time_block) * batch   # last REAL timestep row

    # ---- Host-side weight / bias layout --------------------------------------
    if fused:
        # (D, n_ht * 3 * Ht), hidden-tile-major then gate: per tile the kernel
        # sees a contiguous (D, 3*Ht) slab and slices the dot result per gate
        # at lane-aligned columns.
        wt = W.T.reshape(input_size, 3, num_hidden_tiles, hidden_tile)
        wk = wt.transpose(0, 2, 1, 3).reshape(
            input_size, num_hidden_tiles * 3 * hidden_tile)
        w_spec = pl.BlockSpec((input_size, 3 * hidden_tile),
                              lambda h, t: (0, h))
    else:
        # Per-gate layout (3, D, H): each gate's weight is a whole slab.
        wk = W.reshape(3, hidden_size, input_size).transpose(0, 2, 1)
        w_spec = pl.BlockSpec((3, input_size, hidden_size),
                              lambda h, t: (0, 0, 0))
    wk = wk.astype(matmul_dtype)

    b3 = (b.reshape(3, num_hidden_tiles, hidden_tile)
           .transpose(1, 0, 2)
           .reshape(num_hidden_tiles * 3, 1, hidden_tile)
           .astype(jnp.float32))
    b_spec = pl.BlockSpec((3, 1, hidden_tile), lambda h, t: (h, 0, 0))

    # Flatten time*batch so a time block is a contiguous row slab; pad tail.
    x2d = X.astype(matmul_dtype).reshape(seq_len * batch, input_size)
    if seq_pad != seq_len:
        x2d = jnp.pad(x2d, ((0, (seq_pad - seq_len) * batch), (0, 0)))

    h0 = (jnp.zeros((batch, hidden_size), jnp.float32)
          if hidden is None else hidden[0].astype(jnp.float32))

    kernel = functools.partial(
        _qrnn_kernel, time_block=time_block, batch=batch,
        hidden_tile=hidden_tile, fused=fused, last_row0=last_row0, unroll=8)

    H2d, hn = pl.pallas_call(
        kernel,
        out_shape=(
            jax.ShapeDtypeStruct((seq_pad * batch, hidden_size), out_dtype),
            jax.ShapeDtypeStruct((batch, hidden_size), out_dtype),
        ),
        grid_spec=pltpu.PrefetchScalarGridSpec(
            num_scalar_prefetch=0,
            grid=(num_hidden_tiles, num_blocks),
            in_specs=[
                pl.BlockSpec((rows_per_block, input_size),
                             lambda h, t: (t, 0)),                  # X block
                w_spec,                                             # W (resident)
                b_spec,                                             # bias
                pl.BlockSpec((batch, hidden_tile), lambda h, t: (0, h)),  # h0
            ],
            out_specs=[
                pl.BlockSpec((rows_per_block, hidden_tile),
                             lambda h, t: (t, h)),                  # H block
                pl.BlockSpec((batch, hidden_tile), lambda h, t: (0, h)),  # h_n
            ],
            scratch_shapes=[
                pltpu.VMEM((rows_per_block, hidden_tile), jnp.float32),  # f*z
                pltpu.VMEM((rows_per_block, hidden_tile), jnp.float32),  # 1-f
                pltpu.VMEM((rows_per_block, hidden_tile), jnp.float32),  # sig(O)
                pltpu.VMEM((rows_per_block, hidden_tile), jnp.float32),  # C slab
                pltpu.VMEM((batch, hidden_tile), jnp.float32),           # c carry
            ],
        ),
        compiler_params=pltpu.CompilerParams(
            # Hidden tiles are independent (recurrence is elementwise in H);
            # the time axis carries the cell state -> sequential.
            dimension_semantics=("parallel", "arbitrary"),
            vmem_limit_bytes=vmem_limit,
        ),
    )(x2d, wk, b3, h0)

    H = H2d[:seq_len * batch].reshape(seq_len, batch, hidden_size)
    return H, hn[None]


def qrnn_layer_reference(X, W, b, hidden=None):
    """Pure-JAX reference of the PyTorch forward (window=1, output_gate=True)."""
    seq_len, batch, _ = X.shape
    hidden_size = W.shape[0] // 3
    Y = jnp.einsum("sbd,hd->sbh", X, W) + b
    Z, F, O = jnp.split(Y, 3, axis=2)
    Z = jnp.tanh(Z)
    F = jax.nn.sigmoid(F)
    c0 = (jnp.zeros((batch, hidden_size), X.dtype)
          if hidden is None else hidden[0])

    def step(c, inputs):
        f_t, z_t = inputs
        c = f_t * z_t + (1.0 - f_t) * c
        return c, c

    c_last, C = jax.lax.scan(step, c0, (F, Z))
    H = jax.nn.sigmoid(O) * C
    return H, c_last[None]


def _make_inputs(key, seq_len, batch, input_size, hidden_size):
    kx, kh, kw, kb = jax.random.split(key, 4)
    X = jax.random.normal(kx, (seq_len, batch, input_size), jnp.float32)
    hidden = jax.random.normal(kh, (1, batch, hidden_size), jnp.float32)
    bound = 1.0 / (input_size ** 0.5)
    W = jax.random.uniform(kw, (3 * hidden_size, input_size), jnp.float32,
                           minval=-bound, maxval=bound)
    b = jax.random.uniform(kb, (3 * hidden_size,), jnp.float32,
                           minval=-bound, maxval=bound)
    return X, W, b, hidden


if __name__ == "__main__":
    seq_len, batch, input_size = 16, 8, 32
    key = jax.random.PRNGKey(0)

    # ---- H = 32 (per-gate path, small shapes) --------------------------------
    X, W, b, hidden = _make_inputs(key, seq_len, batch, input_size, 32)
    H_ref, h_n_ref = qrnn_layer_reference(X, W, b, hidden)

    # f32 MXU inputs, 2 time blocks (exercises the carried cell state).
    H, h_n = qrnn_layer_forward(X, W, b, hidden, time_block=8)
    jax.block_until_ready((H, h_n))
    assert H.shape == (seq_len, batch, 32) and h_n.shape == (1, batch, 32)
    assert jnp.allclose(H, H_ref, atol=1e-3, rtol=1e-3)
    assert jnp.allclose(h_n, h_n_ref, atol=1e-3, rtol=1e-3)

    # bf16 MXU inputs (recommended on v6e/v7x); recurrence stays f32.
    H16, h_n16 = qrnn_layer_forward(X, W, b, hidden, time_block=8,
                                    matmul_dtype=jnp.bfloat16)
    jax.block_until_ready((H16, h_n16))
    assert jnp.allclose(H16, H_ref, atol=5e-2, rtol=5e-2)
    assert jnp.allclose(h_n16, h_n_ref, atol=5e-2, rtol=5e-2)

    # seq_len not a multiple of time_block -> padding path + h_n taken from the
    # last REAL timestep inside the last block.
    Hp, h_np = qrnn_layer_forward(X, W, b, hidden, time_block=6)
    jax.block_until_ready((Hp, h_np))
    assert jnp.allclose(Hp, H_ref, atol=1e-3, rtol=1e-3)
    assert jnp.allclose(h_np, h_n_ref, atol=1e-3, rtol=1e-3)

    # ---- H = 128: fused single (D, 3H) matmul + fori_loop recurrence --------
    X2, W2, b2, hidden2 = _make_inputs(jax.random.PRNGKey(1),
                                       seq_len, batch, input_size, 128)
    H2_ref, h2_ref = qrnn_layer_reference(X2, W2, b2, hidden2)
    H2, h2 = qrnn_layer_forward(X2, W2, b2, hidden2)   # auto time_block
    jax.block_until_ready((H2, h2))
    assert jnp.allclose(H2, H2_ref, atol=1e-3, rtol=1e-3)
    assert jnp.allclose(h2, h2_ref, atol=1e-3, rtol=1e-3)

    # ---- H = 256, 2 hidden tiles: leading "parallel" grid axis (v7x 2nd TC) --
    X3, W3, b3_, hidden3 = _make_inputs(jax.random.PRNGKey(2),
                                        seq_len, batch, input_size, 256)
    H3_ref, h3_ref = qrnn_layer_reference(X3, W3, b3_, hidden3)
    H3, h3 = qrnn_layer_forward(X3, W3, b3_, hidden3, time_block=8,
                                num_hidden_tiles=2)
    jax.block_until_ready((H3, h3))
    assert jnp.allclose(H3, H3_ref, atol=1e-3, rtol=1e-3)
    assert jnp.allclose(h3, h3_ref, atol=1e-3, rtol=1e-3)

    # TODO(synk): window=2 (prevX concat), bidirectional, training-mode zoneout
    # and drelu variants are not active in the default module config; omitted.
    print("KERNEL_OK")
</pallas_src>

<mosaic_0001>
module attributes {stable_mosaic.version = 11 : i64} {
  func.func @_qrnn_kernel(%arg0: i32, %arg1: i32, %arg2: memref<64x32xf32, #tpu.memory_space<vmem>>, %arg3: memref<3x32x32xf32, #tpu.memory_space<vmem>>, %arg4: memref<3x1x32xf32, #tpu.memory_space<vmem>>, %arg5: memref<8x32xf32, #tpu.memory_space<vmem>>, %arg6: memref<64x32xf32, #tpu.memory_space<vmem>>, %arg7: memref<8x32xf32, #tpu.memory_space<vmem>>, %arg8: memref<64x32xf32, #tpu.memory_space<vmem>>, %arg9: memref<64x32xf32, #tpu.memory_space<vmem>>, %arg10: memref<64x32xf32, #tpu.memory_space<vmem>>, %arg11: memref<64x32xf32, #tpu.memory_space<vmem>>, %arg12: memref<8x32xf32, #tpu.memory_space<vmem>>) attributes {dimension_semantics = [#tpu.dimension_semantics<parallel>, #tpu.dimension_semantics<arbitrary>], iteration_bounds = array<i64: 1, 2>, scalar_prefetch = 0 : i64, scratch_operands = 5 : i64, tpu.core_type = #tpu.core_type<tc>, window_params = [{transform_indices = @transform_0, window_bounds = array<i64: 64, 32>}, {pipeline_mode = #tpu.pipeline_mode<synchronous>, transform_indices = @transform_1, window_bounds = array<i64: 3, 32, 32>}, {transform_indices = @transform_2, window_bounds = array<i64: 3, 1, 32>}, {transform_indices = @transform_3, window_bounds = array<i64: 8, 32>}, {transform_indices = @transform_4, window_bounds = array<i64: 64, 32>}, {transform_indices = @transform_5, window_bounds = array<i64: 8, 32>}]} {
    %c0_i32 = arith.constant 0 : i32
    %0 = arith.cmpi eq, %arg1, %c0_i32 : i32
    %1 = arith.extui %0 : i1 to i32
    %c0_i32_0 = arith.constant 0 : i32
    %2 = arith.cmpi ne, %1, %c0_i32_0 : i32
    scf.if %2 {
      %c0_81 = arith.constant 0 : index
      %c0_82 = arith.constant 0 : index
      %91 = vector.load %arg5[%c0_81, %c0_82] : memref<8x32xf32, #tpu.memory_space<vmem>>, vector<8x32xf32>
      %c0_83 = arith.constant 0 : index
      %c0_84 = arith.constant 0 : index
      %92 = vector.load %arg12[%c0_83, %c0_84] : memref<8x32xf32, #tpu.memory_space<vmem>>, vector<8x32xf32>
      tpu.vector_store %arg12[%c0_83, %c0_84], %91 {strides = array<i32>} : memref<8x32xf32, #tpu.memory_space<vmem>>, vector<8x32xf32>,
    } else {
    }
    %c0 = arith.constant 0 : index
    %c0_1 = arith.constant 0 : index
    %3 = vector.load %arg2[%c0, %c0_1] : memref<64x32xf32, #tpu.memory_space<vmem>>, vector<64x32xf32>
    %c0_2 = arith.constant 0 : index
    %c0_3 = arith.constant 0 : index
    %c0_4 = arith.constant 0 : index
    %4 = vector.load %arg3[%c0_2, %c0_3, %c0_4] : memref<3x32x32xf32, #tpu.memory_space<vmem>>, vector<1x32x32xf32>
    %5 = vector.shape_cast %4 : vector<1x32x32xf32> to vector<32x32xf32>
    %cst = arith.constant dense<0.000000e+00> : vector<64x32xf32>
    %6 = tpu.matmul %3, %5, %cst {dimension_numbers = #tpu.dot_dimension_numbers<[1], [0], [0], [1], [0, 0, 1, 1], [], []>} : vector<64x32xf32>, vector<32x32xf32>, vector<64x32xf32> -> vector<64x32xf32>
    %c0_5 = arith.constant 0 : index
    %c0_6 = arith.constant 0 : index
    %c0_7 = arith.constant 0 : index
    %7 = vector.load %arg4[%c0_5, %c0_6, %c0_7] : memref<3x1x32xf32, #tpu.memory_space<vmem>>, vector<1x1x32xf32>
    %8 = vector.shape_cast %7 : vector<1x1x32xf32> to vector<1x32xf32>
    %9 = vector.broadcast %8 : vector<1x32xf32> to vector<64x32xf32>
    %10 = arith.addf %6, %9 : vector<64x32xf32>
    %c1 = arith.constant 1 : index
    %c0_8 = arith.constant 0 : index
    %c0_9 = arith.constant 0 : index
    %11 = vector.load %arg3[%c1, %c0_8, %c0_9] : memref<3x32x32xf32, #tpu.memory_space<vmem>>, vector<1x32x32xf32>
    %12 = vector.shape_cast %11 : vector<1x32x32xf32> to vector<32x32xf32>
    %cst_10 = arith.constant dense<0.000000e+00> : vector<64x32xf32>
    %13 = tpu.matmul %3, %12, %cst_10 {dimension_numbers = #tpu.dot_dimension_numbers<[1], [0], [0], [1], [0, 0, 1, 1], [], []>} : vector<64x32xf32>, vector<32x32xf32>, vector<64x32xf32> -> vector<64x32xf32>
    %c1_11 = arith.constant 1 : index
    %c0_12 = arith.constant 0 : index
    %c0_13 = arith.constant 0 : index
    %14 = vector.load %arg4[%c1_11, %c0_12, %c0_13] : memref<3x1x32xf32, #tpu.memory_space<vmem>>, vector<1x1x32xf32>
    %15 = vector.shape_cast %14 : vector<1x1x32xf32> to vector<1x32xf32>
    %16 = vector.broadcast %15 : vector<1x32xf32> to vector<64x32xf32>
    %17 = arith.addf %13, %16 : vector<64x32xf32>
    %c2 = arith.constant 2 : index
    %c0_14 = arith.constant 0 : index
    %c0_15 = arith.constant 0 : index
    %18 = vector.load %arg3[%c2, %c0_14, %c0_15] : memref<3x32x32xf32, #tpu.memory_space<vmem>>, vector<1x32x32xf32>
    %19 = vector.shape_cast %18 : vector<1x32x32xf32> to vector<32x32xf32>
    %cst_16 = arith.constant dense<0.000000e+00> : vector<64x32xf32>
    %20 = tpu.matmul %3, %19, %cst_16 {dimension_numbers = #tpu.dot_dimension_numbers<[1], [0], [0], [1], [0, 0, 1, 1], [], []>} : vector<64x32xf32>, vector<32x32xf32>, vector<64x32xf32> -> vector<64x32xf32>
    %c2_17 = arith.constant 2 : index
    %c0_18 = arith.constant 0 : index
    %c0_19 = arith.constant 0 : index
    %21 = vector.load %arg4[%c2_17, %c0_18, %c0_19] : memref<3x1x32xf32, #tpu.memory_space<vmem>>, vector<1x1x32xf32>
    %22 = vector.shape_cast %21 : vector<1x1x32xf32> to vector<1x32xf32>
    %23 = vector.broadcast %22 : vector<1x32xf32> to vector<64x32xf32>
    %24 = arith.addf %20, %23 : vector<64x32xf32>
    %25 = math.tanh %10 : vector<64x32xf32>
    %26 = arith.negf %17 : vector<64x32xf32>
    %27 = math.exp %26 : vector<64x32xf32>
    %cst_20 = arith.constant 1.000000e+00 : f32
    %28 = vector.broadcast %cst_20 : f32 to vector<64x32xf32>
    %29 = arith.addf %28, %27 : vector<64x32xf32>
    %30 = arith.divf %28, %29 : vector<64x32xf32>
    %31 = arith.mulf %30, %25 : vector<64x32xf32>
    %c0_21 = arith.constant 0 : index
    %c0_22 = arith.constant 0 : index
    %32 = vector.load %arg8[%c0_21, %c0_22] : memref<64x32xf32, #tpu.memory_space<vmem>>, vector<64x32xf32>
    tpu.vector_store %arg8[%c0_21, %c0_22], %31 {strides = array<i32>} : memref<64x32xf32, #tpu.memory_space<vmem>>, vector<64x32xf32>,
    %cst_23 = arith.constant 1.000000e+00 : f32
    %33 = vector.broadcast %cst_23 : f32 to vector<64x32xf32>
    %34 = arith.subf %33, %30 : vector<64x32xf32>
    %c0_24 = arith.constant 0 : index
    %c0_25 = arith.constant 0 : index
    %35 = vector.load %arg9[%c0_24, %c0_25] : memref<64x32xf32, #tpu.memory_space<vmem>>, vector<64x32xf32>
    tpu.vector_store %arg9[%c0_24, %c0_25], %34 {strides = array<i32>} : memref<64x32xf32, #tpu.memory_space<vmem>>, vector<64x32xf32>,
    %36 = arith.negf %24 : vector<64x32xf32>
    %37 = math.exp %36 : vector<64x32xf32>
    %cst_26 = arith.constant 1.000000e+00 : f32
    %38 = vector.broadcast %cst_26 : f32 to vector<64x32xf32>
    %39 = arith.addf %38, %37 : vector<64x32xf32>
    %40 = arith.divf %38, %39 : vector<64x32xf32>
    %c0_27 = arith.constant 0 : index
    %c0_28 = arith.constant 0 : index
    %41 = vector.load %arg10[%c0_27, %c0_28] : memref<64x32xf32, #tpu.memory_space<vmem>>, vector<64x32xf32>
    tpu.vector_store %arg10[%c0_27, %c0_28], %40 {strides = array<i32>} : memref<64x32xf32, #tpu.memory_space<vmem>>, vector<64x32xf32>,
    %c0_29 = arith.constant 0 : index
    %c0_30 = arith.constant 0 : index
    %42 = vector.load %arg12[%c0_29, %c0_30] : memref<8x32xf32, #tpu.memory_space<vmem>>, vector<8x32xf32>
    %c0_31 = arith.constant 0 : index
    %c0_32 = arith.constant 0 : index
    %43 = vector.load %arg8[%c0_31, %c0_32] : memref<64x32xf32, #tpu.memory_space<vmem>>, vector<8x32xf32>
    %c0_33 = arith.constant 0 : index
    %c0_34 = arith.constant 0 : index
    %44 = vector.load %arg9[%c0_33, %c0_34] : memref<64x32xf32, #tpu.memory_space<vmem>>, vector<8x32xf32>
    %45 = arith.mulf %44, %42 : vector<8x32xf32>
    %46 = arith.addf %43, %45 : vector<8x32xf32>
    %c0_35 = arith.constant 0 : index
    %c0_36 = arith.constant 0 : index
    %47 = vector.load %arg11[%c0_35, %c0_36] : memref<64x32xf32, #tpu.memory_space<vmem>>, vector<8x32xf32>
    tpu.vector_store %arg11[%c0_35, %c0_36], %46 {strides = array<i32>} : memref<64x32xf32, #tpu.memory_space<vmem>>, vector<8x32xf32>,
    %c8 = arith.constant 8 : index
    %c0_37 = arith.constant 0 : index
    %48 = vector.load %arg8[%c8, %c0_37] : memref<64x32xf32, #tpu.memory_space<vmem>>, vector<8x32xf32>
    %c8_38 = arith.constant 8 : index
    %c0_39 = arith.constant 0 : index
    %49 = vector.load %arg9[%c8_38, %c0_39] : memref<64x32xf32, #tpu.memory_space<vmem>>, vector<8x32xf32>
    %50 = arith.mulf %49, %46 : vector<8x32xf32>
    %51 = arith.addf %48, %50 : vector<8x32xf32>
    %c8_40 = arith.constant 8 : index
    %c0_41 = arith.constant 0 : index
    %52 = vector.load %arg11[%c8_40, %c0_41] : memref<64x32xf32, #tpu.memory_space<vmem>>, vector<8x32xf32>
    tpu.vector_store %arg11[%c8_40, %c0_41], %51 {strides = array<i32>} : memref<64x32xf32, #tpu.memory_space<vmem>>, vector<8x32xf32>,
    %c16 = arith.constant 16 : index
    %c0_42 = arith.constant 0 : index
    %53 = vector.load %arg8[%c16, %c0_42] : memref<64x32xf32, #tpu.memory_space<vmem>>, vector<8x32xf32>
    %c16_43 = arith.constant 16 : index
    %c0_44 = arith.constant 0 : index
    %54 = vector.load %arg9[%c16_43, %c0_44] : memref<64x32xf32, #tpu.memory_space<vmem>>, vector<8x32xf32>
    %55 = arith.mulf %54, %51 : vector<8x32xf32>
    %56 = arith.addf %53, %55 : vector<8x32xf32>
    %c16_45 = arith.constant 16 : index
    %c0_46 = arith.constant 0 : index
    %57 = vector.load %arg11[%c16_45, %c0_46] : memref<64x32xf32, #tpu.memory_space<vmem>>, vector<8x32xf32>
    tpu.vector_store %arg11[%c16_45, %c0_46], %56 {strides = array<i32>} : memref<64x32xf32, #tpu.memory_space<vmem>>, vector<8x32xf32>,
    %c24 = arith.constant 24 : index
    %c0_47 = arith.constant 0 : index
    %58 = vector.load %arg8[%c24, %c0_47] : memref<64x32xf32, #tpu.memory_space<vmem>>, vector<8x32xf32>
    %c24_48 = arith.constant 24 : index
    %c0_49 = arith.constant 0 : index
    %59 = vector.load %arg9[%c24_48, %c0_49] : memref<64x32xf32, #tpu.memory_space<vmem>>, vector<8x32xf32>
    %60 = arith.mulf %59, %56 : vector<8x32xf32>
    %61 = arith.addf %58, %60 : vector<8x32xf32>
    %c24_50 = arith.constant 24 : index
    %c0_51 = arith.constant 0 : index
    %62 = vector.load %arg11[%c24_50, %c0_51] : memref<64x32xf32, #tpu.memory_space<vmem>>, vector<8x32xf32>
    tpu.vector_store %arg11[%c24_50, %c0_51], %61 {strides = array<i32>} : memref<64x32xf32, #tpu.memory_space<vmem>>, vector<8x32xf32>,
    %c32 = arith.constant 32 : index
    %c0_52 = arith.constant 0 : index
    %63 = vector.load %arg8[%c32, %c0_52] : memref<64x32xf32, #tpu.memory_space<vmem>>, vector<8x32xf32>
    %c32_53 = arith.constant 32 : index
    %c0_54 = arith.constant 0 : index
    %64 = vector.load %arg9[%c32_53, %c0_54] : memref<64x32xf32, #tpu.memory_space<vmem>>, vector<8x32xf32>
    %65 = arith.mulf %64, %61 : vector<8x32xf32>
    %66 = arith.addf %63, %65 : vector<8x32xf32>
    %c32_55 = arith.constant 32 : index
    %c0_56 = arith.constant 0 : index
    %67 = vector.load %arg11[%c32_55, %c0_56] : memref<64x32xf32, #tpu.memory_space<vmem>>, vector<8x32xf32>
    tpu.vector_store %arg11[%c32_55, %c0_56], %66 {strides = array<i32>} : memref<64x32xf32, #tpu.memory_space<vmem>>, vector<8x32xf32>,
    %c40 = arith.constant 40 : index
    %c0_57 = arith.constant 0 : index
    %68 = vector.load %arg8[%c40, %c0_57] : memref<64x32xf32, #tpu.memory_space<vmem>>, vector<8x32xf32>
    %c40_58 = arith.constant 40 : index
    %c0_59 = arith.constant 0 : index
    %69 = vector.load %arg9[%c40_58, %c0_59] : memref<64x32xf32, #tpu.memory_space<vmem>>, vector<8x32xf32>
    %70 = arith.mulf %69, %66 : vector<8x32xf32>
    %71 = arith.addf %68, %70 : vector<8x32xf32>
    %c40_60 = arith.constant 40 : index
    %c0_61 = arith.constant 0 : index
    %72 = vector.load %arg11[%c40_60, %c0_61] : memref<64x32xf32, #tpu.memory_space<vmem>>, vector<8x32xf32>
    tpu.vector_store %arg11[%c40_60, %c0_61], %71 {strides = array<i32>} : memref<64x32xf32, #tpu.memory_space<vmem>>, vector<8x32xf32>,
    %c48 = arith.constant 48 : index
    %c0_62 = arith.constant 0 : index
    %73 = vector.load %arg8[%c48, %c0_62] : memref<64x32xf32, #tpu.memory_space<vmem>>, vector<8x32xf32>
    %c48_63 = arith.constant 48 : index
    %c0_64 = arith.constant 0 : index
    %74 = vector.load %arg9[%c48_63, %c0_64] : memref<64x32xf32, #tpu.memory_space<vmem>>, vector<8x32xf32>
    %75 = arith.mulf %74, %71 : vector<8x32xf32>
    %76 = arith.addf %73, %75 : vector<8x32xf32>
    %c48_65 = arith.constant 48 : index
    %c0_66 = arith.constant 0 : index
    %77 = vector.load %arg11[%c48_65, %c0_66] : memref<64x32xf32, #tpu.memory_space<vmem>>, vector<8x32xf32>
    tpu.vector_store %arg11[%c48_65, %c0_66], %76 {strides = array<i32>} : memref<64x32xf32, #tpu.memory_space<vmem>>, vector<8x32xf32>,
    %c56 = arith.constant 56 : index
    %c0_67 = arith.constant 0 : index
    %78 = vector.load %arg8[%c56, %c0_67] : memref<64x32xf32, #tpu.memory_space<vmem>>, vector<8x32xf32>
    %c56_68 = arith.constant 56 : index
    %c0_69 = arith.constant 0 : index
    %79 = vector.load %arg9[%c56_68, %c0_69] : memref<64x32xf32, #tpu.memory_space<vmem>>, vector<8x32xf32>
    %80 = arith.mulf %79, %76 : vector<8x32xf32>
    %81 = arith.addf %78, %80 : vector<8x32xf32>
    %c56_70 = arith.constant 56 : index
    %c0_71 = arith.constant 0 : index
    %82 = vector.load %arg11[%c56_70, %c0_71] : memref<64x32xf32, #tpu.memory_space<vmem>>, vector<8x32xf32>
    tpu.vector_store %arg11[%c56_70, %c0_71], %81 {strides = array<i32>} : memref<64x32xf32, #tpu.memory_space<vmem>>, vector<8x32xf32>,
    %c0_72 = arith.constant 0 : index
    %c0_73 = arith.constant 0 : index
    %83 = vector.load %arg12[%c0_72, %c0_73] : memref<8x32xf32, #tpu.memory_space<vmem>>, vector<8x32xf32>
    tpu.vector_store %arg12[%c0_72, %c0_73], %81 {strides = array<i32>} : memref<8x32xf32, #tpu.memory_space<vmem>>, vector<8x32xf32>,
    %c0_74 = arith.constant 0 : index
    %c0_75 = arith.constant 0 : index
    %84 = vector.load %arg10[%c0_74, %c0_75] : memref<64x32xf32, #tpu.memory_space<vmem>>, vector<64x32xf32>
    %c0_76 = arith.constant 0 : index
    %c0_77 = arith.constant 0 : index
    %85 = vector.load %arg11[%c0_76, %c0_77] : memref<64x32xf32, #tpu.memory_space<vmem>>, vector<64x32xf32>
    %86 = arith.mulf %84, %85 : vector<64x32xf32>
    %c0_78 = arith.constant 0 : index
    %c0_79 = arith.constant 0 : index
    %87 = vector.load %arg6[%c0_78, %c0_79] : memref<64x32xf32, #tpu.memory_space<vmem>>, vector<64x32xf32>
    tpu.vector_store %arg6[%c0_78, %c0_79], %86 {strides = array<i32>} : memref<64x32xf32, #tpu.memory_space<vmem>>, vector<64x32xf32>,
    %c1_i32 = arith.constant 1 : i32
    %88 = arith.cmpi eq, %arg1, %c1_i32 : i32
    %89 = arith.extui %88 : i1 to i32
    %c0_i32_80 = arith.constant 0 : i32
    %90 = arith.cmpi ne, %89, %c0_i32_80 : i32
    scf.if %90 {
      %c56_81 = arith.constant 56 : index
      %c0_82 = arith.constant 0 : index
      %91 = vector.load %arg11[%c56_81, %c0_82] : memref<64x32xf32, #tpu.memory_space<vmem>>, vector<8x32xf32>
      %c0_83 = arith.constant 0 : index
      %c0_84 = arith.constant 0 : index
      %92 = vector.load %arg7[%c0_83, %c0_84] : memref<8x32xf32, #tpu.memory_space<vmem>>, vector<8x32xf32>
      tpu.vector_store %arg7[%c0_83, %c0_84], %91 {strides = array<i32>} : memref<8x32xf32, #tpu.memory_space<vmem>>, vector<8x32xf32>,
    } else {
    }
    return
  }
  func.func @transform_0(%arg0: i32, %arg1: i32) -> (i32, i32) {
    %c0_i32 = arith.constant 0 : i32
    %c0_i32_0 = arith.constant 0 : i32
    return %arg1, %c0_i32 : i32, i32
  }
  func.func @transform_1(%arg0: i32, %arg1: i32) -> (i32, i32, i32) {
    %c0_i32 = arith.constant 0 : i32
    %c0_i32_0 = arith.constant 0 : i32
    %c0_i32_1 = arith.constant 0 : i32
    %c0_i32_2 = arith.constant 0 : i32
    return %c0_i32, %c0_i32_0, %c0_i32_1 : i32, i32, i32
  }
  func.func @transform_2(%arg0: i32, %arg1: i32) -> (i32, i32, i32) {
    %c0_i32 = arith.constant 0 : i32
    %c0_i32_0 = arith.constant 0 : i32
    %c0_i32_1 = arith.constant 0 : i32
    return %arg0, %c0_i32, %c0_i32_0 : i32, i32, i32
  }
  func.func @transform_3(%arg0: i32, %arg1: i32) -> (i32, i32) {
    %c0_i32 = arith.constant 0 : i32
    %c0_i32_0 = arith.constant 0 : i32
    return %c0_i32, %arg0 : i32, i32
  }
  func.func @transform_4(%arg0: i32, %arg1: i32) -> (i32, i32) {
    %c0_i32 = arith.constant 0 : i32
    return %arg1, %arg0 : i32, i32
  }
  func.func @transform_5(%arg0: i32, %arg1: i32) -> (i32, i32) {
    %c0_i32 = arith.constant 0 : i32
    %c0_i32_0 = arith.constant 0 : i32
    return %c0_i32, %arg0 : i32, i32
  }
}

</mosaic_0001>

<llo_original>
// kernel: tpu_custom_call.1
$region0: #{tpu_custom_call.1}
  #allocation0 [shape = 'u32[]', space=smem, size = 0x4, offset = 0x4, fixed_abs, tag = 'smem constant byte address 0x4 - core index']
  #allocation1 [shape = 'u32[144,128]{1,0:T(1,128)}', space=vmem, size = 0x12000, scoped, tag = 'internal scratch']
  #allocation2 [shape = 'f32[64,32]{1,0:T(8,128)}', space=vmem, size = 0x8000, scoped, tag = 'scratch operand']
  #allocation3 [shape = 'f32[64,32]{1,0:T(8,128)}', space=vmem, size = 0x8000, scoped, tag = 'scratch operand']
  #allocation4 [shape = 'f32[64,32]{1,0:T(8,128)}', space=vmem, size = 0x8000, scoped, tag = 'scratch operand']
  #allocation5 [shape = 'f32[64,32]{1,0:T(8,128)}', space=vmem, size = 0x8000, scoped, tag = 'scratch operand']
  #allocation6 [shape = 'f32[8,32]{1,0:T(8,128)}', space=vmem, size = 0x1000, scoped, tag = 'scratch operand']
  %s0 = inlined_call_operand.vmem [shape: f32[128,32], index: 0, kind: input, shape index: {}]
  %s1 = inlined_call_operand.vmem [shape: f32[3,32,32], index: 1, kind: input, shape index: {}]
  %s2 = inlined_call_operand.vmem [shape: f32[3,1,32], index: 2, kind: input, shape index: {}]
  %s3 = inlined_call_operand.vmem [shape: f32[8,32], index: 3, kind: input, shape index: {}]
  %s4 = inlined_call_operand.vmem [shape: f32[128,32], index: 4, kind: output, shape index: {0}]
  %s5 = inlined_call_operand.hbm [shape: f32[8,32], index: 5, kind: output, shape index: {1}]
  %6 = xla_tuple %s4, %s5
  %s7 = sld [smem:[#allocation0]]
  $region65: #{tpu_custom_call.1} parent=0
    _
  %s9 = ssub.s32 1, %s7
  %s10 = scalar_select 0, %s9, %s7
  $region1: #{tpu_custom_call.1} parent=0
    #allocation7 [shape = 'u8[4096]{0}', space=vmem, size = 0x1000, scoped, tag = 'output window, operand 1, single buffered']
    #allocation8 [shape = 's32[2]{0}', space=sflag, size = 0x8, scoped, tag = 'scoped memory for tpu_custom_call.1']
    %11 = vsyncpa [#allocation8], 0
    loop: start=0, step=1, limit=4
    $region2: #{tpu_custom_call.1} parent=1 // loop_pre_header
      _
    $region3: #{tpu_custom_call.1} parent=1 // loop_header
      %s13 = sphi 0, %s17
      %p14 = scmp.ge.s32.totalorder %s13, 4
      %s20 = sphi 0, %s32
      %s21 = sphi 0, %s28
      %s22 = sphi 0, %s20
      %s23 = sphi 0, %s21
      %s24 = sphi 0, %s22
      %s25 = sphi 0, %s23
      %s35 = sphi 0, %s37
      %s38 = sphi 0, %s35
      %s39 = sphi 0, %s38
      %s55 = sphi 0, %s39
      %s59 = sphi 0, %s59
      %s61 = sphi 0, %s59
      %s62 = sphi 0, %s61
      %s76 = sphi 0, %s62
      %s82 = sphi 0, %s84
      %s85 = sphi 0, %s82
      %s86 = sphi 0, %s85
      %s102 = sphi 0, %s86
      %s108 = sphi 0, %s110
      %s111 = sphi 0, %s108
      %s112 = sphi 0, %s111
      %s128 = sphi 0, %s112
      %s136 = sphi 0, %s138
      %s139 = sphi 0, %s136
      %s140 = sphi 0, %s139
      %s156 = sphi 0, %s140
      %s162 = sphi 0, %s164
      %s165 = sphi 0, %s162
      %s166 = sphi 0, %s165
      %s182 = sphi 0, %s166
    $region4: #{tpu_custom_call.1} parent=1 // loop_header_branch
      %16 = sbr.rel (%p14) target = $region8
    $region5: #{tpu_custom_call.1} parent=1 // loop_body
      %s18 = ssub.s32 %s13, 1
      %s19 = ssub.s32 %s13, 2
      %s26 = sadd.s32 1, %s21
      %p27 = scmp.ge.s32.totalorder %s26, 2
      %s28 = scalar_select %p27, 0, %s26
      %s29 = sadd.s32 1, %s20
      %s30 = scalar_select %p27, %s29, %s20
      %p31 = scmp.ge.s32.totalorder %s30, 1
      %s32 = scalar_select %p31, 0, %s30
      %s33 = ssub.s32 %s21, %s28
      %p34 = scmp.eq.s32.totalorder %s33, 0
      %s36 = sadd.s32 %s35, 1
      %s37 = scalar_select %p34, %s35, %s36
      %p40 = pneg %p34
      %p41 = scmp.eq.s32.totalorder %s13, 1
      %p42 = por %p40, %p41
      %p43 = scmp.ne.s32.totalorder %s35, %s38
      %p44 = scmp.eq.s32.totalorder %s13, 0
      %p45 = por %p43, %p44
      %p46 = scmp.ne.s32.totalorder %s35, %s38
      %p47 = scmp.eq.s32.totalorder %s18, 1
      %p48 = por %p46, %p47
      %p49 = scmp.ne.s32.totalorder %s38, %s39
      %p50 = scmp.eq.s32.totalorder %s18, 0
      %p51 = por %p49, %p50
      %p52 = scmp.ne.s32.totalorder %s38, %s39
      %p53 = scmp.eq.s32.totalorder %s19, 1
      %p54 = por %p52, %p53
      %p56 = scmp.ne.s32.totalorder %s39, %s55
      %p57 = scmp.eq.s32.totalorder %s19, 0
      %p58 = por %p56, %p57
      %s60 = sadd.s32 %s59, 1
      %p63 = scmp.eq.s32.totalorder %s13, 1
      %p64 = scmp.ne.s32.totalorder %s59, %s61
      %p65 = scmp.eq.s32.totalorder %s13, 0
      %p66 = por %p64, %p65
      %p67 = scmp.ne.s32.totalorder %s59, %s61
      %p68 = scmp.eq.s32.totalorder %s18, 1
      %p69 = por %p67, %p68
      %p70 = scmp.ne.s32.totalorder %s61, %s62
      %p71 = scmp.eq.s32.totalorder %s18, 0
      %p72 = por %p70, %p71
      %p73 = scmp.ne.s32.totalorder %s61, %s62
      %p74 = scmp.eq.s32.totalorder %s19, 1
      %p75 = por %p73, %p74
      %p77 = scmp.ne.s32.totalorder %s62, %s76
      %p78 = scmp.eq.s32.totalorder %s19, 0
      %p79 = por %p77, %p78
      %s80 = ssub.s32 %s20, %s32
      %p81 = scmp.eq.s32.totalorder %s80, 0
      %s83 = sadd.s32 %s82, 1
      %s84 = scalar_select %p81, %s82, %s83
      %p87 = pneg %p81
      %p88 = scmp.eq.s32.totalorder %s13, 1
      %p89 = por %p87, %p88
      %p90 = scmp.ne.s32.totalorder %s82, %s85
      %p91 = scmp.eq.s32.totalorder %s13, 0
      %p92 = por %p90, %p91
      %p93 = scmp.ne.s32.totalorder %s82, %s85
      %p94 = scmp.eq.s32.totalorder %s18, 1
      %p95 = por %p93, %p94
      %p96 = scmp.ne.s32.totalorder %s85, %s86
      %p97 = scmp.eq.s32.totalorder %s18, 0
      %p98 = por %p96, %p97
      %p99 = scmp.ne.s32.totalorder %s85, %s86
      %p100 = scmp.eq.s32.totalorder %s19, 1
      %p101 = por %p99, %p100
      %p103 = scmp.ne.s32.totalorder %s86, %s102
      %p104 = scmp.eq.s32.totalorder %s19, 0
      %p105 = por %p103, %p104
      %s106 = ssub.s32 %s20, %s32
      %p107 = scmp.eq.s32.totalorder %s106, 0
      %s109 = sadd.s32 %s108, 1
      %s110 = scalar_select %p107, %s108, %s109
      %p113 = pneg %p107
      %p114 = scmp.eq.s32.totalorder %s13, 1
      %p115 = por %p113, %p114
      %p116 = scmp.ne.s32.totalorder %s108, %s111
      %p117 = scmp.eq.s32.totalorder %s13, 0
      %p118 = por %p116, %p117
      %p119 = scmp.ne.s32.totalorder %s108, %s111
      %p120 = scmp.eq.s32.totalorder %s18, 1
      %p121 = por %p119, %p120
      %p122 = scmp.ne.s32.totalorder %s111, %s112
      %p123 = scmp.eq.s32.totalorder %s18, 0
      %p124 = por %p122, %p123
      %p125 = scmp.ne.s32.totalorder %s111, %s112
      %p126 = scmp.eq.s32.totalorder %s19, 1
      %p127 = por %p125, %p126
      %p129 = scmp.ne.s32.totalorder %s112, %s128
      %p130 = scmp.eq.s32.totalorder %s19, 0
      %p131 = por %p129, %p130
      %s132 = ssub.s32 %s21, %s28
      %s133 = ssub.s32 %s20, %s32
      %s134 = sor.u32 %s132, %s133
      %p135 = scmp.eq.s32.totalorder %s134, 0
      %s137 = sadd.s32 %s136, 1
      %s138 = scalar_select %p135, %s136, %s137
      %p141 = pneg %p135
      %p142 = scmp.eq.s32.totalorder %s13, 1
      %p143 = por %p141, %p142
      %p144 = scmp.ne.s32.totalorder %s136, %s139
      %p145 = scmp.eq.s32.totalorder %s13, 0
      %p146 = por %p144, %p145
      %p147 = scmp.ne.s32.totalorder %s136, %s139
      %p148 = scmp.eq.s32.totalorder %s18, 1
      %p149 = por %p147, %p148
      %p150 = scmp.ne.s32.totalorder %s139, %s140
      %p151 = scmp.eq.s32.totalorder %s18, 0
      %p152 = por %p150, %p151
      %p153 = scmp.ne.s32.totalorder %s139, %s140
      %p154 = scmp.eq.s32.totalorder %s19, 1
      %p155 = por %p153, %p154
      %p157 = scmp.ne.s32.totalorder %s140, %s156
      %p158 = scmp.eq.s32.totalorder %s19, 0
      %p159 = por %p157, %p158
      %s160 = ssub.s32 %s20, %s32
      %p161 = scmp.eq.s32.totalorder %s160, 0
      %s163 = sadd.s32 %s162, 1
      %s164 = scalar_select %p161, %s162, %s163
      %p167 = pneg %p161
      %p168 = scmp.eq.s32.totalorder %s13, 1
      %p169 = por %p167, %p168
      %p170 = scmp.ne.s32.totalorder %s162, %s165
      %p171 = scmp.eq.s32.totalorder %s13, 0
      %p172 = por %p170, %p171
      %p173 = scmp.ne.s32.totalorder %s162, %s165
      %p174 = scmp.eq.s32.totalorder %s18, 1
      %p175 = por %p173, %p174
      %p176 = scmp.ne.s32.totalorder %s165, %s166
      %p177 = scmp.eq.s32.totalorder %s18, 0
      %p178 = por %p176, %p177
      %p179 = scmp.ne.s32.totalorder %s165, %s166
      %p180 = scmp.eq.s32.totalorder %s19, 1
      %p181 = por %p179, %p180
      %p183 = scmp.ne.s32.totalorder %s166, %s182
      %p184 = scmp.eq.s32.totalorder %s19, 0
      %p185 = por %p183, %p184
      %p186 = scmp.le.s32.totalorder 1, %s13
      %p187 = scmp.lt.s32.totalorder %s13, 3
      %p188 = pnand %p186, %p187
      %p189 = pneg %p188
      // Predicated region
      $region9: #{tpu_custom_call.1} parent=5 // pred_check
        _
      $region10: #{tpu_custom_call.1} parent=5 // pred_check_branch
        %191 = sbr.rel (%p188) target = $region12
      $region11: #{tpu_custom_call.1} parent=5 // pred_region
        %s192 = ssub.s32 %s13, 1
        // Predicated region
        $region13: #{tpu_custom_call.1} parent=11 // pred_check
          %p193 = pneg %p72
        $region14: #{tpu_custom_call.1} parent=11 // pred_check_branch
          %195 = sbr.rel (%p193) target = $region16
        $region15: #{tpu_custom_call.1} parent=11 // pred_region
          _
        $region16: #{tpu_custom_call.1} parent=11 // pred_fallthru
          _
        // Predicated region
        $region17: #{tpu_custom_call.1} parent=11 // pred_check
          %p196 = pneg %p98
        $region18: #{tpu_custom_call.1} parent=11 // pred_check_branch
          %198 = sbr.rel (%p196) target = $region20
        $region19: #{tpu_custom_call.1} parent=11 // pred_region
          %s199 = smul.u32 3, %s22
          %p200 = scmp.lt.s32.totalorder %s199, 2
          %s201 = scalar_select %p200, %s199, 2
          %s202 = scalar_lea.vmem %s2, %s201
          %s203 = smul.u32 3, %s22
        $region20: #{tpu_custom_call.1} parent=11 // pred_fallthru
          _
        // Predicated region
        $region21: #{tpu_custom_call.1} parent=11 // pred_check
          %p204 = pneg %p124
        $region22: #{tpu_custom_call.1} parent=11 // pred_check_branch
          %206 = sbr.rel (%p204) target = $region24
        $region23: #{tpu_custom_call.1} parent=11 // pred_region
          %p207 = scmp.lt.s32.totalorder %s22, 0
          %s208 = scalar_select %p207, %s22, 0
          %s209 = smul.addr %s208, 8
          %s210 = scalar_lea.vmem %s3, %s209
        $region24: #{tpu_custom_call.1} parent=11 // pred_fallthru
          _
      $region12: #{tpu_custom_call.1} parent=5 // pred_fallthru
        _
      %p211 = scmp.lt.s32.totalorder %s13, 2
      // Predicated region
      $region25: #{tpu_custom_call.1} parent=5 // pred_check
        %p212 = pneg %p211
      $region26: #{tpu_custom_call.1} parent=5 // pred_check_branch
        %214 = sbr.rel (%p212) target = $region28
      $region27: #{tpu_custom_call.1} parent=5 // pred_region
        // Predicated region
        $region29: #{tpu_custom_call.1} parent=27 // pred_check
          %p215 = pneg %p45
        $region30: #{tpu_custom_call.1} parent=27 // pred_check_branch
          %217 = sbr.rel (%p215) target = $region32
        $region31: #{tpu_custom_call.1} parent=27 // pred_region
          %s218 = smul.u32 8, %s21
          %p219 = scmp.lt.s32.totalorder %s218, 15
          %s220 = scalar_select %p219, %s218, 15
          %s221 = smul.addr %s220, 8
          %s222 = scalar_lea.vmem %s0, %s221
          %s223 = smul.u32 8, %s21
        $region32: #{tpu_custom_call.1} parent=27 // pred_fallthru
          _
      $region28: #{tpu_custom_call.1} parent=5 // pred_fallthru
        _
      %p224 = scmp.le.s32.totalorder 1, %s13
      %p225 = scmp.lt.s32.totalorder %s13, 3
      %p226 = pnand %p224, %p225
      %p227 = pneg %p226
      // Predicated region
      $region33: #{tpu_custom_call.1} parent=5 // pred_check
        _
      $region34: #{tpu_custom_call.1} parent=5 // pred_check_branch
        %229 = sbr.rel (%p226) target = $region36
      $region35: #{tpu_custom_call.1} parent=5 // pred_region
        %s230 = ssub.s32 %s13, 1
        %s231 = smul.u32 8, %s23
        %p232 = scmp.lt.s32.totalorder %s231, 15
        %s233 = scalar_select %p232, %s231, 15
        %s234 = smul.addr %s233, 8
        %s235 = scalar_lea.vmem %s0, %s234
        %p236 = pneg %p51
        %p237 = pneg %p48
        %p238 = pneg %p72
        %p239 = pneg %p69
        %s240 = smul.u32 3, %s22
        %p241 = scmp.lt.s32.totalorder %s240, 2
        %s242 = scalar_select %p241, %s240, 2
        %s243 = scalar_lea.vmem %s2, %s242
        %p244 = pneg %p98
        %p245 = pneg %p95
        %p246 = scmp.lt.s32.totalorder %s22, 0
        %s247 = scalar_select %p246, %s22, 0
        %s248 = smul.addr %s247, 8
        %s249 = scalar_lea.vmem %s3, %s248
        %p250 = pneg %p124
        %p251 = pneg %p121
        %p252 = pneg %p152
        %p253 = pneg %p149
        %s254 = smul.u32 8, %s23
        %p255 = scmp.lt.s32.totalorder %s254, 15
        %s256 = scalar_select %p255, %s254, 15
        %p257 = scmp.lt.s32.totalorder %s22, 0
        %s258 = scalar_select %p257, %s22, 0
        %s259 = sadd.s32 %s258, %s256
        %s260 = smul.addr %s259, 8
        %s261 = scalar_lea.vmem %s4, %s260
        %p262 = pneg %p178
        %p263 = pneg %p175
        %s264 = smul.u32 8, %s23
        %p265 = scmp.lt.s32.totalorder %s264, 15
        %s266 = scalar_select %p265, %s264, 15
        %s267 = smul.addr %s266, 8
        %s268 = scalar_lea.vmem %s0, %s267
        %s269 = smul.u32 8, %s23
        %s270 = smul.u32 3, %s22
        %p271 = scmp.lt.s32.totalorder %s270, 2
        %s272 = scalar_select %p271, %s270, 2
        %s273 = scalar_lea.vmem %s2, %s272
        %s274 = smul.u32 3, %s22
        %p275 = scmp.lt.s32.totalorder %s22, 0
        %s276 = scalar_select %p275, %s22, 0
        %s277 = smul.addr %s276, 8
        %s278 = scalar_lea.vmem %s3, %s277
        %s279 = smul.u32 8, %s23
        %p280 = scmp.lt.s32.totalorder %s279, 15
        %s281 = scalar_select %p280, %s279, 15
        %p282 = scmp.lt.s32.totalorder %s22, 0
        %s283 = scalar_select %p282, %s22, 0
        %s284 = sadd.s32 %s283, %s281
        %s285 = smul.addr %s284, 8
        %s286 = scalar_lea.vmem %s4, %s285
        %s287 = smul.u32 8, %s23
        %p288 = scmp.eq.s32.totalorder %s23, 0
        // Predicated region
        $region37: #{tpu_custom_call.1} parent=35 // pred_check
          %p289 = pneg %p288
        $region38: #{tpu_custom_call.1} parent=35 // pred_check_branch
          %291 = sbr.rel (%p289) target = $region40
        $region39: #{tpu_custom_call.1} parent=35 // pred_region
          %v292 = vld [vmem:[%s278] sm:$0xff]
          %vm293 = vcmask 261120
          %294 = vst.msk [vmem:[#allocation6] sm:$0xff] %vm293, %v292
        $region40: #{tpu_custom_call.1} parent=35 // pred_fallthru
          _
        %v295 = vld [vmem:[%s268] sm:$0xff]
        %v296 = vld [vmem:[%s268 + $0x8] sm:$0xff]
        %v297 = vld [vmem:[%s268 + $0x10] sm:$0xff]
        %v298 = vld [vmem:[%s268 + $0x18] sm:$0xff]
        %v299 = vld [vmem:[%s268 + $0x20] sm:$0xff]
        %v300 = vld [vmem:[%s268 + $0x28] sm:$0xff]
        %v301 = vld [vmem:[%s268 + $0x30] sm:$0xff]
        %v302 = vld [vmem:[%s268 + $0x38] sm:$0xff]
        %v303 = vld [vmem:[%s1] sm:$0xff]
        %v304 = vld [vmem:[%s1 + $0x8] sm:$0xff]
        %v305 = vld [vmem:[%s1 + $0x10] sm:$0xff]
        %v306 = vld [vmem:[%s1 + $0x18] sm:$0xff]
        %v307 = vld [vmem:[%s273] sm:$0x1]
        %v309 = vlaneseq
        %v310 = vshrl.u32 %v309, 7
        %v311 = vsub.s32 0, %v310
        %v312 = vrot.slane %v307, %v311
        %vm314 = vcmask 261120
        %v316 = vsel %vm314, %v295, 0
        %v319 = vsel %vm314, %v296, 0
        %v322 = vsel %vm314, %v297, 0
        %v325 = vsel %vm314, %v298, 0
        %v328 = vsel %vm314, %v299, 0
        %v331 = vsel %vm314, %v300, 0
        %v334 = vsel %vm314, %v301, 0
        %v337 = vsel %vm314, %v302, 0
        %339 = vmatprep.subr.mxu0 0.0
        %340 = vmatpush1.msra.mxu0 %v303
        %341 = vmatprep.subr.mxu0 0.0
        %342 = vmatpush1.msra.mxu0 %v304
        %343 = vmatprep.subr.mxu0 0.0
        %344 = vmatpush1.msra.mxu0 %v305
        %345 = vmatprep.subr.mxu0 0.0
        %346 = vmatpush1.msra.mxu0 %v306
        %347 = vmatprep.subr.mxu0 0.0
        %348 = vmatpush1.msra.mxu0 0.0
        %349 = vmatprep.subr.mxu0 0.0
        %350 = vmatpush1.msra.mxu0 0.0
        %351 = vmatprep.subr.mxu0 0.0
        %352 = vmatpush1.msra.mxu0 0.0
        %353 = vmatprep.subr.mxu0 0.0
        %354 = vmatpush1.msra.mxu0 0.0
        %355 = vmatprep.subr.mxu0 0.0
        %356 = vmatpush1.msra.mxu0 0.0
        %357 = vmatprep.subr.mxu0 0.0
        %358 = vmatpush1.msra.mxu0 0.0
        %359 = vmatprep.subr.mxu0 0.0
        %360 = vmatpush1.msra.mxu0 0.0
        %361 = vmatprep.subr.mxu0 0.0
        %362 = vmatpush1.msra.mxu0 0.0
        %363 = vmatprep.subr.mxu0 0.0
        %364 = vmatpush1.msra.mxu0 0.0
        %365 = vmatprep.subr.mxu0 0.0
        %366 = vmatpush1.msra.mxu0 0.0
        %367 = vmatprep.subr.mxu0 0.0
        %368 = vmatpush1.msra.mxu0 0.0
        %369 = vmatprep.subr.mxu0 0.0
        %370 = vmatpush1.msra.mxu0 0.0
        %371 = vmatprep.subr.mxu0 0.0
        %372 = vmatpush1.msra.mxu0 0.0
        %373 = vmatprep.subr.mxu0 0.0
        %374 = vmatpush1.msra.mxu0 0.0
        %375 = vmatprep.subr.mxu0 0.0
        %376 = vmatpush1.msra.mxu0 0.0
        %377 = vmatprep.subr.mxu0 0.0
        %378 = vmatpush1.msra.mxu0 0.0
        %379 = vmatprep.subr.mxu0 0.0
        %380 = vmatpush1.msra.mxu0 0.0
        %381 = vmatprep.subr.mxu0 0.0
        %382 = vmatpush1.msra.mxu0 0.0
        %383 = vmatprep.subr.mxu0 0.0
        %384 = vmatpush1.msra.mxu0 0.0
        %385 = vmatprep.subr.mxu0 0.0
        %386 = vmatpush1.msra.mxu0 0.0
        %387 = vmatprep.subr.mxu0 0.0
        %388 = vmatpush1.msra.mxu0 0.0
        %389 = vmatprep.subr.mxu0 0.0
        %390 = vmatpush1.msra.mxu0 0.0
        %391 = vmatprep.subr.mxu0 0.0
        %392 = vmatpush1.msra.mxu0 0.0
        %393 = vmatprep.subr.mxu0 0.0
        %394 = vmatpush1.msra.mxu0 0.0
        %395 = vmatprep.subr.mxu0 0.0
        %396 = vmatpush1.msra.mxu0 0.0
        %397 = vmatprep.subr.mxu0 0.0
        %398 = vmatpush1.msra.mxu0 0.0
        %399 = vmatprep.subr.mxu0 0.0
        %400 = vmatpush1.msra.mxu0 0.0
        %401 = vmatprep.subr.mxu0 0.0
        %402 = vmatpush1.msra.mxu0 0.0
        %403 = vmatprep.mubr.f32.mxu0 0.0
        %404 = vmatmul.mubr.f32.gmra.mrb[0].mxu0 %v316
        %v405 = vpop.f32.mrb[0].mxu0
        %v406 = vadd.f32 %v312, %v405
        %v407 = vpop.f32.mrb[0].mxu0
        %408 = vmatprep.mubr.f32.mxu0 0.0
        %409 = vmatmul.mubr.f32.gmra.mrb[0].mxu0 %v319
        %v410 = vpop.f32.mrb[0].mxu0
        %v411 = vadd.f32 %v312, %v410
        %v412 = vpop.f32.mrb[0].mxu0
        %413 = vmatprep.mubr.f32.mxu0 0.0
        %414 = vmatmul.mubr.f32.gmra.mrb[0].mxu0 %v322
        %v415 = vpop.f32.mrb[0].mxu0
        %v416 = vadd.f32 %v312, %v415
        %v417 = vpop.f32.mrb[0].mxu0
        %418 = vmatprep.mubr.f32.mxu0 0.0
        %419 = vmatmul.mubr.f32.gmra.mrb[0].mxu0 %v325
        %v420 = vpop.f32.mrb[0].mxu0
        %v421 = vadd.f32 %v312, %v420
        %v422 = vpop.f32.mrb[0].mxu0
        %423 = vmatprep.mubr.f32.mxu0 0.0
        %424 = vmatmul.mubr.f32.gmra.mrb[0].mxu0 %v328
        %v425 = vpop.f32.mrb[0].mxu0
        %v426 = vadd.f32 %v312, %v425
        %v427 = vpop.f32.mrb[0].mxu0
        %428 = vmatprep.mubr.f32.mxu0 0.0
        %429 = vmatmul.mubr.f32.gmra.mrb[0].mxu0 %v331
        %v430 = vpop.f32.mrb[0].mxu0
        %v431 = vadd.f32 %v312, %v430
        %v432 = vpop.f32.mrb[0].mxu0
        %433 = vmatprep.mubr.f32.mxu0 0.0
        %434 = vmatmul.mubr.f32.gmra.mrb[0].mxu0 %v334
        %v435 = vpop.f32.mrb[0].mxu0
        %v436 = vadd.f32 %v312, %v435
        %v437 = vpop.f32.mrb[0].mxu0
        %438 = vmatprep.mubr.f32.mxu0 0.0
        %439 = vmatmul.mubr.f32.gmra.mrb[0].mxu0 %v337
        %v440 = vpop.f32.mrb[0].mxu0
        %v441 = vadd.f32 %v312, %v440
        %v442 = vpop.f32.mrb[0].mxu0
        %443 = vdwg.mxu0
        %s444 = scalar_lea.vmem %s1, 32
        %v445 = vld [vmem:[%s444] sm:$0xff]
        %v446 = vld [vmem:[%s444 + $0x8] sm:$0xff]
        %v447 = vld [vmem:[%s444 + $0x10] sm:$0xff]
        %v448 = vld [vmem:[%s444 + $0x18] sm:$0xff]
        %s449 = scalar_lea.vmem %s273, 1
        %v450 = vld [vmem:[%s449] sm:$0x1]
        %v452 = vlaneseq
        %v453 = vshrl.u32 %v452, 7
        %v454 = vsub.s32 0, %v453
        %v455 = vrot.slane %v450, %v454
        %457 = vmatprep.subr.mxu0 0.0
        %458 = vmatpush1.msra.mxu0 %v445
        %459 = vmatprep.subr.mxu0 0.0
        %460 = vmatpush1.msra.mxu0 %v446
        %461 = vmatprep.subr.mxu0 0.0
        %462 = vmatpush1.msra.mxu0 %v447
        %463 = vmatprep.subr.mxu0 0.0
        %464 = vmatpush1.msra.mxu0 %v448
        %465 = vmatprep.subr.mxu0 0.0
        %466 = vmatpush1.msra.mxu0 0.0
        %467 = vmatprep.subr.mxu0 0.0
        %468 = vmatpush1.msra.mxu0 0.0
        %469 = vmatprep.subr.mxu0 0.0
        %470 = vmatpush1.msra.mxu0 0.0
        %471 = vmatprep.subr.mxu0 0.0
        %472 = vmatpush1.msra.mxu0 0.0
        %473 = vmatprep.subr.mxu0 0.0
        %474 = vmatpush1.msra.mxu0 0.0
        %475 = vmatprep.subr.mxu0 0.0
        %476 = vmatpush1.msra.mxu0 0.0
        %477 = vmatprep.subr.mxu0 0.0
        %478 = vmatpush1.msra.mxu0 0.0
        %479 = vmatprep.subr.mxu0 0.0
        %480 = vmatpush1.msra.mxu0 0.0
        %481 = vmatprep.subr.mxu0 0.0
        %482 = vmatpush1.msra.mxu0 0.0
        %483 = vmatprep.subr.mxu0 0.0
        %484 = vmatpush1.msra.mxu0 0.0
        %485 = vmatprep.subr.mxu0 0.0
        %486 = vmatpush1.msra.mxu0 0.0
        %487 = vmatprep.subr.mxu0 0.0
        %488 = vmatpush1.msra.mxu0 0.0
        %489 = vmatprep.subr.mxu0 0.0
        %490 = vmatpush1.msra.mxu0 0.0
        %491 = vmatprep.subr.mxu0 0.0
        %492 = vmatpush1.msra.mxu0 0.0
        %493 = vmatprep.subr.mxu0 0.0
        %494 = vmatpush1.msra.mxu0 0.0
        %495 = vmatprep.subr.mxu0 0.0
        %496 = vmatpush1.msra.mxu0 0.0
        %497 = vmatprep.subr.mxu0 0.0
        %498 = vmatpush1.msra.mxu0 0.0
        %499 = vmatprep.subr.mxu0 0.0
        %500 = vmatpush1.msra.mxu0 0.0
        %501 = vmatprep.subr.mxu0 0.0
        %502 = vmatpush1.msra.mxu0 0.0
        %503 = vmatprep.subr.mxu0 0.0
        %504 = vmatpush1.msra.mxu0 0.0
        %505 = vmatprep.subr.mxu0 0.0
        %506 = vmatpush1.msra.mxu0 0.0
        %507 = vmatprep.subr.mxu0 0.0
        %508 = vmatpush1.msra.mxu0 0.0
        %509 = vmatprep.subr.mxu0 0.0
        %510 = vmatpush1.msra.mxu0 0.0
        %511 = vmatprep.subr.mxu0 0.0
        %512 = vmatpush1.msra.mxu0 0.0
        %513 = vmatprep.subr.mxu0 0.0
        %514 = vmatpush1.msra.mxu0 0.0
        %515 = vmatprep.subr.mxu0 0.0
        %516 = vmatpush1.msra.mxu0 0.0
        %517 = vmatprep.subr.mxu0 0.0
        %518 = vmatpush1.msra.mxu0 0.0
        %519 = vmatprep.subr.mxu0 0.0
        %520 = vmatpush1.msra.mxu0 0.0
        %521 = vmatprep.mubr.f32.mxu0 0.0
        %522 = vmatmul.mubr.f32.gmra.mrb[0].mxu0 %v316
        %v523 = vpop.f32.mrb[0].mxu0
        %v524 = vadd.f32 %v455, %v523
        %v525 = vpop.f32.mrb[0].mxu0
        %526 = vmatprep.mubr.f32.mxu0 0.0
        %527 = vmatmul.mubr.f32.gmra.mrb[0].mxu0 %v319
        %v528 = vpop.f32.mrb[0].mxu0
        %v529 = vadd.f32 %v455, %v528
        %v530 = vpop.f32.mrb[0].mxu0
        %531 = vmatprep.mubr.f32.mxu0 0.0
        %532 = vmatmul.mubr.f32.gmra.mrb[0].mxu0 %v322
        %v533 = vpop.f32.mrb[0].mxu0
        %v534 = vadd.f32 %v455, %v533
        %v535 = vpop.f32.mrb[0].mxu0
        %536 = vmatprep.mubr.f32.mxu0 0.0
        %537 = vmatmul.mubr.f32.gmra.mrb[0].mxu0 %v325
        %v538 = vpop.f32.mrb[0].mxu0
        %v539 = vadd.f32 %v455, %v538
        %v540 = vpop.f32.mrb[0].mxu0
        %541 = vmatprep.mubr.f32.mxu0 0.0
        %542 = vmatmul.mubr.f32.gmra.mrb[0].mxu0 %v328
        %v543 = vpop.f32.mrb[0].mxu0
        %v544 = vadd.f32 %v455, %v543
        %v545 = vpop.f32.mrb[0].mxu0
        %546 = vmatprep.mubr.f32.mxu0 0.0
        %547 = vmatmul.mubr.f32.gmra.mrb[0].mxu0 %v331
        %v548 = vpop.f32.mrb[0].mxu0
        %v549 = vadd.f32 %v455, %v548
        %v550 = vpop.f32.mrb[0].mxu0
        %551 = vmatprep.mubr.f32.mxu0 0.0
        %552 = vmatmul.mubr.f32.gmra.mrb[0].mxu0 %v334
        %v553 = vpop.f32.mrb[0].mxu0
        %v554 = vadd.f32 %v455, %v553
        %v555 = vpop.f32.mrb[0].mxu0
        %556 = vmatprep.mubr.f32.mxu0 0.0
        %557 = vmatmul.mubr.f32.gmra.mrb[0].mxu0 %v337
        %v558 = vpop.f32.mrb[0].mxu0
        %v559 = vadd.f32 %v455, %v558
        %v560 = vpop.f32.mrb[0].mxu0
        %561 = vdwg.mxu0
        %s562 = scalar_lea.vmem %s1, 64
        %v563 = vld [vmem:[%s562] sm:$0xff]
        %v564 = vld [vmem:[%s562 + $0x8] sm:$0xff]
        %v565 = vld [vmem:[%s562 + $0x10] sm:$0xff]
        %v566 = vld [vmem:[%s562 + $0x18] sm:$0xff]
        %s567 = scalar_lea.vmem %s273, 2
        %v568 = vld [vmem:[%s567] sm:$0x1]
        %v570 = vlaneseq
        %v571 = vshrl.u32 %v570, 7
        %v572 = vsub.s32 0, %v571
        %v573 = vrot.slane %v568, %v572
        %575 = vmatprep.subr.mxu0 0.0
        %576 = vmatpush1.msra.mxu0 %v563
        %577 = vmatprep.subr.mxu0 0.0
        %578 = vmatpush1.msra.mxu0 %v564
        %579 = vmatprep.subr.mxu0 0.0
        %580 = vmatpush1.msra.mxu0 %v565
        %581 = vmatprep.subr.mxu0 0.0
        %582 = vmatpush1.msra.mxu0 %v566
        %583 = vmatprep.subr.mxu0 0.0
        %584 = vmatpush1.msra.mxu0 0.0
        %585 = vmatprep.subr.mxu0 0.0
        %586 = vmatpush1.msra.mxu0 0.0
        %587 = vmatprep.subr.mxu0 0.0
        %588 = vmatpush1.msra.mxu0 0.0
        %589 = vmatprep.subr.mxu0 0.0
        %590 = vmatpush1.msra.mxu0 0.0
        %591 = vmatprep.subr.mxu0 0.0
        %592 = vmatpush1.msra.mxu0 0.0
        %593 = vmatprep.subr.mxu0 0.0
        %594 = vmatpush1.msra.mxu0 0.0
        %595 = vmatprep.subr.mxu0 0.0
        %596 = vmatpush1.msra.mxu0 0.0
        %597 = vmatprep.subr.mxu0 0.0
        %598 = vmatpush1.msra.mxu0 0.0
        %599 = vmatprep.subr.mxu0 0.0
        %600 = vmatpush1.msra.mxu0 0.0
        %601 = vmatprep.subr.mxu0 0.0
        %602 = vmatpush1.msra.mxu0 0.0
        %603 = vmatprep.subr.mxu0 0.0
        %604 = vmatpush1.msra.mxu0 0.0
        %605 = vmatprep.subr.mxu0 0.0
        %606 = vmatpush1.msra.mxu0 0.0
        %607 = vmatprep.subr.mxu0 0.0
        %608 = vmatpush1.msra.mxu0 0.0
        %609 = vmatprep.subr.mxu0 0.0
        %610 = vmatpush1.msra.mxu0 0.0
        %611 = vmatprep.subr.mxu0 0.0
        %612 = vmatpush1.msra.mxu0 0.0
        %613 = vmatprep.subr.mxu0 0.0
        %614 = vmatpush1.msra.mxu0 0.0
        %615 = vmatprep.subr.mxu0 0.0
        %616 = vmatpush1.msra.mxu0 0.0
        %617 = vmatprep.subr.mxu0 0.0
        %618 = vmatpush1.msra.mxu0 0.0
        %619 = vmatprep.subr.mxu0 0.0
        %620 = vmatpush1.msra.mxu0 0.0
        %621 = vmatprep.subr.mxu0 0.0
        %622 = vmatpush1.msra.mxu0 0.0
        %623 = vmatprep.subr.mxu0 0.0
        %624 = vmatpush1.msra.mxu0 0.0
        %625 = vmatprep.subr.mxu0 0.0
        %626 = vmatpush1.msra.mxu0 0.0
        %627 = vmatprep.subr.mxu0 0.0
        %628 = vmatpush1.msra.mxu0 0.0
        %629 = vmatprep.subr.mxu0 0.0
        %630 = vmatpush1.msra.mxu0 0.0
        %631 = vmatprep.subr.mxu0 0.0
        %632 = vmatpush1.msra.mxu0 0.0
        %633 = vmatprep.subr.mxu0 0.0
        %634 = vmatpush1.msra.mxu0 0.0
        %635 = vmatprep.subr.mxu0 0.0
        %636 = vmatpush1.msra.mxu0 0.0
        %637 = vmatprep.subr.mxu0 0.0
        %638 = vmatpush1.msra.mxu0 0.0
        %639 = vmatprep.mubr.f32.mxu0 0.0
        %640 = vmatmul.mubr.f32.gmra.mrb[0].mxu0 %v316
        %v641 = vpop.f32.mrb[0].mxu0
        %v642 = vadd.f32 %v573, %v641
        %v643 = vpop.f32.mrb[0].mxu0
        %644 = vmatprep.mubr.f32.mxu0 0.0
        %645 = vmatmul.mubr.f32.gmra.mrb[0].mxu0 %v319
        %v646 = vpop.f32.mrb[0].mxu0
        %v647 = vadd.f32 %v573, %v646
        %v648 = vpop.f32.mrb[0].mxu0
        %649 = vmatprep.mubr.f32.mxu0 0.0
        %650 = vmatmul.mubr.f32.gmra.mrb[0].mxu0 %v322
        %v651 = vpop.f32.mrb[0].mxu0
        %v652 = vadd.f32 %v573, %v651
        %v653 = vpop.f32.mrb[0].mxu0
        %654 = vmatprep.mubr.f32.mxu0 0.0
        %655 = vmatmul.mubr.f32.gmra.mrb[0].mxu0 %v325
        %v656 = vpop.f32.mrb[0].mxu0
        %v657 = vadd.f32 %v573, %v656
        %v658 = vpop.f32.mrb[0].mxu0
        %659 = vmatprep.mubr.f32.mxu0 0.0
        %660 = vmatmul.mubr.f32.gmra.mrb[0].mxu0 %v328
        %v661 = vpop.f32.mrb[0].mxu0
        %v662 = vadd.f32 %v573, %v661
        %v663 = vpop.f32.mrb[0].mxu0
        %664 = vmatprep.mubr.f32.mxu0 0.0
        %665 = vmatmul.mubr.f32.gmra.mrb[0].mxu0 %v331
        %v666 = vpop.f32.mrb[0].mxu0
        %v667 = vadd.f32 %v573, %v666
        %v668 = vpop.f32.mrb[0].mxu0
        %669 = vmatprep.mubr.f32.mxu0 0.0
        %670 = vmatmul.mubr.f32.gmra.mrb[0].mxu0 %v334
        %v671 = vpop.f32.mrb[0].mxu0
        %v672 = vadd.f32 %v573, %v671
        %v673 = vpop.f32.mrb[0].mxu0
        %674 = vmatprep.mubr.f32.mxu0 0.0
        %675 = vmatmul.mubr.f32.gmra.mrb[0].mxu0 %v337
        %v676 = vpop.f32.mrb[0].mxu0
        %v677 = vadd.f32 %v573, %v676
        %v678 = vpop.f32.mrb[0].mxu0
        %679 = vdwg.mxu0
        %v680 = vtanh.pop %v406
        %v681 = vtanh.pop %v411
        %v682 = vtanh.pop %v416
        %v683 = vtanh.pop %v421
        %v684 = vtanh.pop %v426
        %v685 = vtanh.pop %v431
        %v686 = vtanh.pop %v436
        %v687 = vtanh.pop %v441
        %v688 = vxor.u32 %v524, 2147483648
        %v689 = vxor.u32 %v529, 2147483648
        %v690 = vxor.u32 %v534, 2147483648
        %v691 = vxor.u32 %v539, 2147483648
        %v692 = vxor.u32 %v544, 2147483648
        %v693 = vxor.u32 %v549, 2147483648
        %v694 = vxor.u32 %v554, 2147483648
        %v695 = vxor.u32 %v559, 2147483648
        %v696 = vmul.f32 %v688, 1.442695
        %v697 = vpow.pop %v696
        %v698 = vmul.f32 %v689, 1.442695
        %v699 = vpow.pop %v698
        %v700 = vmul.f32 %v690, 1.442695
        %v701 = vpow.pop %v700
        %v702 = vmul.f32 %v691, 1.442695
        %v703 = vpow.pop %v702
        %v704 = vmul.f32 %v692, 1.442695
        %v705 = vpow.pop %v704
        %v706 = vmul.f32 %v693, 1.442695
        %v707 = vpow.pop %v706
        %v708 = vmul.f32 %v694, 1.442695
        %v709 = vpow.pop %v708
        %v710 = vmul.f32 %v695, 1.442695
        %v711 = vpow.pop %v710
        %v712 = vadd.f32 %v697, 1.0
        %v713 = vadd.f32 %v699, 1.0
        %v714 = vadd.f32 %v701, 1.0
        %v715 = vadd.f32 %v703, 1.0
        %v716 = vadd.f32 %v705, 1.0
        %v717 = vadd.f32 %v707, 1.0
        %v718 = vadd.f32 %v709, 1.0
        %v719 = vadd.f32 %v711, 1.0
        %v720 = vrcp.pop %v712
        %v721 = vmul.f32 1.0, %v720
        %v722 = vrcp.pop %v713
        %v723 = vmul.f32 1.0, %v722
        %v724 = vrcp.pop %v714
        %v725 = vmul.f32 1.0, %v724
        %v726 = vrcp.pop %v715
        %v727 = vmul.f32 1.0, %v726
        %v728 = vrcp.pop %v716
        %v729 = vmul.f32 1.0, %v728
        %v730 = vrcp.pop %v717
        %v731 = vmul.f32 1.0, %v730
        %v732 = vrcp.pop %v718
        %v733 = vmul.f32 1.0, %v732
        %v734 = vrcp.pop %v719
        %v735 = vmul.f32 1.0, %v734
        %v736 = vmul.f32 %v721, %v680
        %v737 = vmul.f32 %v723, %v681
        %v738 = vmul.f32 %v725, %v682
        %v739 = vmul.f32 %v727, %v683
        %v740 = vmul.f32 %v729, %v684
        %v741 = vmul.f32 %v731, %v685
        %v742 = vmul.f32 %v733, %v686
        %v743 = vmul.f32 %v735, %v687
        %744 = vst.msk [vmem:[#allocation2] sm:$0xff] %vm314, %v736
        %745 = vst.msk [vmem:[#allocation2 + $0x8] sm:$0xff] %vm314, %v737
        %746 = vst.msk [vmem:[#allocation2 + $0x10] sm:$0xff] %vm314, %v738
        %747 = vst.msk [vmem:[#allocation2 + $0x18] sm:$0xff] %vm314, %v739
        %748 = vst.msk [vmem:[#allocation2 + $0x20] sm:$0xff] %vm314, %v740
        %749 = vst.msk [vmem:[#allocation2 + $0x28] sm:$0xff] %vm314, %v741
        %750 = vst.msk [vmem:[#allocation2 + $0x30] sm:$0xff] %vm314, %v742
        %751 = vst.msk [vmem:[#allocation2 + $0x38] sm:$0xff] %vm314, %v743
        %v752 = vsub.f32 1.0, %v721
        %v753 = vsub.f32 1.0, %v723
        %v754 = vsub.f32 1.0, %v725
        %v755 = vsub.f32 1.0, %v727
        %v756 = vsub.f32 1.0, %v729
        %v757 = vsub.f32 1.0, %v731
        %v758 = vsub.f32 1.0, %v733
        %v759 = vsub.f32 1.0, %v735
        %760 = vst.msk [vmem:[#allocation3] sm:$0xff] %vm314, %v752
        %761 = vst.msk [vmem:[#allocation3 + $0x8] sm:$0xff] %vm314, %v753
        %762 = vst.msk [vmem:[#allocation3 + $0x10] sm:$0xff] %vm314, %v754
        %763 = vst.msk [vmem:[#allocation3 + $0x18] sm:$0xff] %vm314, %v755
        %764 = vst.msk [vmem:[#allocation3 + $0x20] sm:$0xff] %vm314, %v756
        %765 = vst.msk [vmem:[#allocation3 + $0x28] sm:$0xff] %vm314, %v757
        %766 = vst.msk [vmem:[#allocation3 + $0x30] sm:$0xff] %vm314, %v758
        %767 = vst.msk [vmem:[#allocation3 + $0x38] sm:$0xff] %vm314, %v759
        %v768 = vxor.u32 %v642, 2147483648
        %v769 = vxor.u32 %v647, 2147483648
        %v770 = vxor.u32 %v652, 2147483648
        %v771 = vxor.u32 %v657, 2147483648
        %v772 = vxor.u32 %v662, 2147483648
        %v773 = vxor.u32 %v667, 2147483648
        %v774 = vxor.u32 %v672, 2147483648
        %v775 = vxor.u32 %v677, 2147483648
        %v776 = vmul.f32 %v768, 1.442695
        %v777 = vpow.pop %v776
        %v778 = vmul.f32 %v769, 1.442695
        %v779 = vpow.pop %v778
        %v780 = vmul.f32 %v770, 1.442695
        %v781 = vpow.pop %v780
        %v782 = vmul.f32 %v771, 1.442695
        %v783 = vpow.pop %v782
        %v784 = vmul.f32 %v772, 1.442695
        %v785 = vpow.pop %v784
        %v786 = vmul.f32 %v773, 1.442695
        %v787 = vpow.pop %v786
        %v788 = vmul.f32 %v774, 1.442695
        %v789 = vpow.pop %v788
        %v790 = vmul.f32 %v775, 1.442695
        %v791 = vpow.pop %v790
        %v792 = vadd.f32 %v777, 1.0
        %v793 = vadd.f32 %v779, 1.0
        %v794 = vadd.f32 %v781, 1.0
        %v795 = vadd.f32 %v783, 1.0
        %v796 = vadd.f32 %v785, 1.0
        %v797 = vadd.f32 %v787, 1.0
        %v798 = vadd.f32 %v789, 1.0
        %v799 = vadd.f32 %v791, 1.0
        %v800 = vrcp.pop %v792
        %v801 = vmul.f32 1.0, %v800
        %v802 = vrcp.pop %v793
        %v803 = vmul.f32 1.0, %v802
        %v804 = vrcp.pop %v794
        %v805 = vmul.f32 1.0, %v804
        %v806 = vrcp.pop %v795
        %v807 = vmul.f32 1.0, %v806
        %v808 = vrcp.pop %v796
        %v809 = vmul.f32 1.0, %v808
        %v810 = vrcp.pop %v797
        %v811 = vmul.f32 1.0, %v810
        %v812 = vrcp.pop %v798
        %v813 = vmul.f32 1.0, %v812
        %v814 = vrcp.pop %v799
        %v815 = vmul.f32 1.0, %v814
        %816 = vst.msk [vmem:[#allocation4] sm:$0xff] %vm314, %v801
        %817 = vst.msk [vmem:[#allocation4 + $0x8] sm:$0xff] %vm314, %v803
        %818 = vst.msk [vmem:[#allocation4 + $0x10] sm:$0xff] %vm314, %v805
        %819 = vst.msk [vmem:[#allocation4 + $0x18] sm:$0xff] %vm314, %v807
        %820 = vst.msk [vmem:[#allocation4 + $0x20] sm:$0xff] %vm314, %v809
        %821 = vst.msk [vmem:[#allocation4 + $0x28] sm:$0xff] %vm314, %v811
        %822 = vst.msk [vmem:[#allocation4 + $0x30] sm:$0xff] %vm314, %v813
        %823 = vst.msk [vmem:[#allocation4 + $0x38] sm:$0xff] %vm314, %v815
        %v824 = vld [vmem:[#allocation6] sm:$0xff]
        %v825 = vld [vmem:[#allocation2] sm:$0xff]
        %v826 = vld [vmem:[#allocation3] sm:$0xff]
        %v827 = vmul.f32 %v826, %v824
        %v828 = vadd.f32 %v825, %v827
        %829 = vst.msk [vmem:[#allocation5] sm:$0xff] %vm314, %v828
        %v830 = vld [vmem:[#allocation2 + $0x8] sm:$0xff]
        %v831 = vld [vmem:[#allocation3 + $0x8] sm:$0xff]
        %v832 = vmul.f32 %v831, %v828
        %v833 = vadd.f32 %v830, %v832
        %834 = vst.msk [vmem:[#allocation5 + $0x8] sm:$0xff] %vm314, %v833
        %v835 = vld [vmem:[#allocation2 + $0x10] sm:$0xff]
        %v836 = vld [vmem:[#allocation3 + $0x10] sm:$0xff]
        %v837 = vmul.f32 %v836, %v833
        %v838 = vadd.f32 %v835, %v837
        %839 = vst.msk [vmem:[#allocation5 + $0x10] sm:$0xff] %vm314, %v838
        %v840 = vld [vmem:[#allocation2 + $0x18] sm:$0xff]
        %v841 = vld [vmem:[#allocation3 + $0x18] sm:$0xff]
        %v842 = vmul.f32 %v841, %v838
        %v843 = vadd.f32 %v840, %v842
        %844 = vst.msk [vmem:[#allocation5 + $0x18] sm:$0xff] %vm314, %v843
        %v845 = vld [vmem:[#allocation2 + $0x20] sm:$0xff]
        %v846 = vld [vmem:[#allocation3 + $0x20] sm:$0xff]
        %v847 = vmul.f32 %v846, %v843
        %v848 = vadd.f32 %v845, %v847
        %849 = vst.msk [vmem:[#allocation5 + $0x20] sm:$0xff] %vm314, %v848
        %v850 = vld [vmem:[#allocation2 + $0x28] sm:$0xff]
        %v851 = vld [vmem:[#allocation3 + $0x28] sm:$0xff]
        %v852 = vmul.f32 %v851, %v848
        %v853 = vadd.f32 %v850, %v852
        %854 = vst.msk [vmem:[#allocation5 + $0x28] sm:$0xff] %vm314, %v853
        %v855 = vld [vmem:[#allocation2 + $0x30] sm:$0xff]
        %v856 = vld [vmem:[#allocation3 + $0x30] sm:$0xff]
        %v857 = vmul.f32 %v856, %v853
        %v858 = vadd.f32 %v855, %v857
        %859 = vst.msk [vmem:[#allocation5 + $0x30] sm:$0xff] %vm314, %v858
        %v860 = vld [vmem:[#allocation2 + $0x38] sm:$0xff]
        %v861 = vld [vmem:[#allocation3 + $0x38] sm:$0xff]
        %v862 = vmul.f32 %v861, %v858
        %v863 = vadd.f32 %v860, %v862
        %864 = vst.msk [vmem:[#allocation5 + $0x38] sm:$0xff] %vm314, %v863
        %865 = vst.msk [vmem:[#allocation6] sm:$0xff] %vm314, %v863
        %v866 = vld [vmem:[#allocation4] sm:$0xff]
        %v867 = vld [vmem:[#allocation4 + $0x8] sm:$0xff]
        %v868 = vld [vmem:[#allocation4 + $0x10] sm:$0xff]
        %v869 = vld [vmem:[#allocation4 + $0x18] sm:$0xff]
        %v870 = vld [vmem:[#allocation4 + $0x20] sm:$0xff]
        %v871 = vld [vmem:[#allocation4 + $0x28] sm:$0xff]
        %v872 = vld [vmem:[#allocation4 + $0x30] sm:$0xff]
        %v873 = vld [vmem:[#allocation4 + $0x38] sm:$0xff]
        %v874 = vld [vmem:[#allocation5] sm:$0xff]
        %v875 = vld [vmem:[#allocation5 + $0x8] sm:$0xff]
        %v876 = vld [vmem:[#allocation5 + $0x10] sm:$0xff]
        %v877 = vld [vmem:[#allocation5 + $0x18] sm:$0xff]
        %v878 = vld [vmem:[#allocation5 + $0x20] sm:$0xff]
        %v879 = vld [vmem:[#allocation5 + $0x28] sm:$0xff]
        %v880 = vld [vmem:[#allocation5 + $0x30] sm:$0xff]
        %v881 = vld [vmem:[#allocation5 + $0x38] sm:$0xff]
        %v882 = vmul.f32 %v866, %v874
        %v883 = vmul.f32 %v867, %v875
        %v884 = vmul.f32 %v868, %v876
        %v885 = vmul.f32 %v869, %v877
        %v886 = vmul.f32 %v870, %v878
        %v887 = vmul.f32 %v871, %v879
        %v888 = vmul.f32 %v872, %v880
        %v889 = vmul.f32 %v873, %v881
        %890 = vst.msk [vmem:[%s286] sm:$0xff] %vm314, %v882
        %891 = vst.msk [vmem:[%s286 + $0x8] sm:$0xff] %vm314, %v883
        %892 = vst.msk [vmem:[%s286 + $0x10] sm:$0xff] %vm314, %v884
        %893 = vst.msk [vmem:[%s286 + $0x18] sm:$0xff] %vm314, %v885
        %894 = vst.msk [vmem:[%s286 + $0x20] sm:$0xff] %vm314, %v886
        %895 = vst.msk [vmem:[%s286 + $0x28] sm:$0xff] %vm314, %v887
        %896 = vst.msk [vmem:[%s286 + $0x30] sm:$0xff] %vm314, %v888
        %897 = vst.msk [vmem:[%s286 + $0x38] sm:$0xff] %vm314, %v889
        %p898 = scmp.eq.s32.totalorder %s23, 1
        // Predicated region
        $region41: #{tpu_custom_call.1} parent=35 // pred_check
          %p899 = pneg %p898
        $region42: #{tpu_custom_call.1} parent=35 // pred_check_branch
          %901 = sbr.rel (%p899) target = $region44
        $region43: #{tpu_custom_call.1} parent=35 // pred_region
          %v902 = vld [vmem:[#allocation5 + $0x38] sm:$0xff]
          %903 = vst.msk [vmem:[#allocation7] sm:$0xff] %vm314, %v902
        $region44: #{tpu_custom_call.1} parent=35 // pred_fallthru
          _
        %s904 = smul.u32 8, %s23
        %p905 = scmp.lt.s32.totalorder %s904, 15
        %s906 = scalar_select %p905, %s904, 15
        %p907 = scmp.lt.s32.totalorder %s22, 0
        %s908 = scalar_select %p907, %s22, 0
        %s909 = sadd.s32 %s908, %s906
        %s910 = smul.addr %s909, 8
        %s911 = scalar_lea.vmem %s4, %s910
        // Predicated region
        $region45: #{tpu_custom_call.1} parent=35 // pred_check
          %p912 = pneg %p149
        $region46: #{tpu_custom_call.1} parent=35 // pred_check_branch
          %914 = sbr.rel (%p912) target = $region48
        $region47: #{tpu_custom_call.1} parent=35 // pred_region
          %s915 = smul.u32 8, %s23
        $region48: #{tpu_custom_call.1} parent=35 // pred_fallthru
          _
        // Predicated region
        $region49: #{tpu_custom_call.1} parent=35 // pred_check
          %p916 = pneg %p175
        $region50: #{tpu_custom_call.1} parent=35 // pred_check_branch
          %918 = sbr.rel (%p916) target = $region52
        $region51: #{tpu_custom_call.1} parent=35 // pred_region
          %s920 = ssub.s32 128, 128
          %921 = vsyncadd [#allocation8], %s920
          %s922 = smul.addr %s22, 128
          %s923 = scalar_lea.hbm %s5, %s922
          %s925 = sshll.u32 [#allocation7], 4
          %s926 = int_to_ptr.vmem [resolvable:$true] %s925
          %928 = dma.vmem_to_hbm [thread:$0]  %s926, 128, %s923, [#allocation8]
        $region52: #{tpu_custom_call.1} parent=35 // pred_fallthru
          _
        // Predicated region
        $region53: #{tpu_custom_call.1} parent=35 // pred_check
          %p929 = pneg %p175
        $region54: #{tpu_custom_call.1} parent=35 // pred_check_branch
          %931 = sbr.rel (%p929) target = $region56
        $region55: #{tpu_custom_call.1} parent=35 // pred_region
          %932 = dma.done [#allocation8], 128
        $region56: #{tpu_custom_call.1} parent=35 // pred_fallthru
          _
      $region36: #{tpu_custom_call.1} parent=5 // pred_fallthru
        _
      %p933 = scmp.le.s32.totalorder 2, %s13
      // Predicated region
      $region57: #{tpu_custom_call.1} parent=5 // pred_check
        %p934 = pneg %p933
      $region58: #{tpu_custom_call.1} parent=5 // pred_check_branch
        %936 = sbr.rel (%p934) target = $region60
      $region59: #{tpu_custom_call.1} parent=5 // pred_region
        %s937 = ssub.s32 %s13, 2
        // Predicated region
        $region61: #{tpu_custom_call.1} parent=59 // pred_check
          %p938 = pneg %p155
        $region62: #{tpu_custom_call.1} parent=59 // pred_check_branch
          %940 = sbr.rel (%p938) target = $region64
        $region63: #{tpu_custom_call.1} parent=59 // pred_region
          %s941 = smul.u32 8, %s25
          %p942 = scmp.lt.s32.totalorder %s941, 15
          %s943 = scalar_select %p942, %s941, 15
          %p944 = scmp.lt.s32.totalorder %s24, 0
          %s945 = scalar_select %p944, %s24, 0
          %s946 = sadd.s32 %s945, %s943
          %s947 = smul.addr %s946, 8
          %s948 = scalar_lea.vmem %s4, %s947
        $region64: #{tpu_custom_call.1} parent=59 // pred_fallthru
          _
      $region60: #{tpu_custom_call.1} parent=5 // pred_fallthru
        _
    $region6: #{tpu_custom_call.1} parent=1 // loop_footer
      %s17 = sadd.s32 1, %s13
    $region7: #{tpu_custom_call.1} parent=1 // loop_footer_branch
      %12 = sbr.rel target = $region3
    $region8: #{tpu_custom_call.1} parent=1 // loop_exit
      _
    %949 = vsyncpa [#allocation8], 1
    %s950 = scalar_lea.sflag [#allocation8], 1
    %951 = vsyncpa %s950, 1

</llo_original>
